<compile_context>
chip_gen: v7x
topology: tpu7x:2x2x1
jax: 0.10.0
libtpu: 0.0.40
codegen_flags: <defaults>
</compile_context>

<pallas_src>
import functools

import jax
import jax.numpy as jnp
from jax.experimental import pallas as pl
from jax.experimental.pallas import tpu as pltpu

LANE = 128       # vreg lane width
SUBLANE = 8      # vreg sublane count


@functools.lru_cache(maxsize=1)
def _chip_config():
    """Static, per-generation tile / split / VMEM choices."""
    kind = ""
    try:
        kind = (jax.devices()[0].device_kind or "").lower()
    except Exception:
        pass
    if ("v7" in kind) or ("tpu7" in kind):
        # v7x: 2 TCs/chip, ~3.2 TB/s, 64 MiB VMEM.  8192-row f32 tile = 4 MiB
        # per input x 3 inputs x 2 pipeline buffers = 24 MiB -> raise the
        # scoped VMEM limit.  Leading "parallel" split axis of size 2 lets the
        # two TensorCores each stream half of the rows.
        return dict(block_rows_max=8192, num_splits=2, vmem_limit=48 << 20)
    # v5e / v6e (single TC): 4096-row tile = 2 MiB/input x 3 x 2 = 12 MiB,
    # fits the default scoped VMEM limit on both; no split axis (avoids the
    # wasted duplicate clamped block on odd block counts).
    return dict(block_rows_max=4096, num_splits=1, vmem_limit=None)


def _kd_loss_kernel(s_ref, t_ref, g_ref, out_ref, *,
                    lam_rm, valid_rows, block_rows, inner_steps,
                    boundary_start, any_boundary):
    """Accumulate sum(|s-g| + lam_rm*|s-t|) into a lane-dense (8,128) partial.

    out_ref : VMEM f32[1, 8, 128] partial-sum block for this split; its block
              index does not depend on the inner (reduction) grid axis, so it
              stays resident in VMEM across it (accumulator pattern).
    """
    p = pl.program_id(0)
    k = pl.program_id(1)

    @pl.when(k == 0)
    def _init():
        out_ref[...] = jnp.zeros_like(out_ref)

    # Cast at the VPU; inputs stream from HBM in their native dtype.
    s = s_ref[...].astype(jnp.float32)
    t = t_ref[...].astype(jnp.float32)
    g = g_ref[...].astype(jnp.float32)

    # lambda_rm is static -> fold the weight into the per-element accumulation.
    d = jnp.abs(s - g) + lam_rm * jnp.abs(s - t)

    def _accumulate(vals):
        # (block_rows, 128) -> (block_rows//8, 8, 128); reduce the leading
        # axis: pure VPU adds into a vreg-shaped accumulator (no XLU, no
        # scalar read-modify-write chain).
        out_ref[0] += vals.reshape(block_rows // SUBLANE, SUBLANE, LANE).sum(axis=0)

    if any_boundary:
        blk = p * inner_steps + k             # intended (unclamped) block idx
        is_boundary = blk >= boundary_start   # last (partial) block / clamped dup

        @pl.when(jnp.logical_not(is_boundary))
        def _interior():
            _accumulate(d)

        @pl.when(is_boundary)
        def _boundary():
            # Row-granularity mask (lanes of a valid row are always real data,
            # and row indices stay far inside int32 range).
            row0 = blk * block_rows
            ridx = jax.lax.broadcasted_iota(jnp.int32, (block_rows, LANE), 0)
            _accumulate(jnp.where((row0 + ridx) < valid_rows, d, 0.0))
    else:
        _accumulate(d)


@functools.partial(jax.jit,
                   static_argnames=("lambda_p", "lambda_rm", "block_rows_max"))
def sample_kd_loss(student_output, teacher_output, ground_truth,
                   lambda_p=0.5, lambda_rm=0.5, block_rows_max=None):
    """JAX/Pallas equivalent of sampleKDLoss.forward (scalar float32 loss).

    loss = mean|s-g| + lambda_rm * mean|s-t|
    # TODO(synk): L_p uses `criterion[1]`, which is undefined in the source
    # module, so the lambda_p * L_p term is omitted.
    """
    n_elems = student_output.size
    lam_rm = float(lambda_rm)

    cfg = _chip_config()
    num_splits = cfg["num_splits"]
    if block_rows_max is None:
        brm = cfg["block_rows_max"]
    else:
        brm = max(SUBLANE, (int(block_rows_max) // SUBLANE) * SUBLANE)

    s_flat = student_output.reshape(-1)   # contiguous reshape: free
    t_flat = teacher_output.reshape(-1)
    g_flat = ground_truth.reshape(-1)

    aligned = n_elems - (n_elems % LANE)  # lane-aligned prefix length
    rows = aligned // LANE

    if rows < SUBLANE:
        # Tiny input (< 1024 elements): a kernel launch is not worth it.
        sf = s_flat.astype(jnp.float32)
        tf = t_flat.astype(jnp.float32)
        gf = g_flat.astype(jnp.float32)
        total = jnp.sum(jnp.abs(sf - gf)) + lam_rm * jnp.sum(jnp.abs(sf - tf))
        return total / jnp.float32(n_elems)

    # Sub-128-element tail: tiny plain-JAX reduction (no padded full copy).
    if aligned < n_elems:
        st = s_flat[aligned:].astype(jnp.float32)
        tt = t_flat[aligned:].astype(jnp.float32)
        gt_ = g_flat[aligned:].astype(jnp.float32)
        tail_sum = jnp.sum(jnp.abs(st - gt_)) + lam_rm * jnp.sum(jnp.abs(st - tt))
        # NOTE: for lane-misaligned element counts the prefix slice below may
        # materialize one copy of the aligned prefix; element counts that are
        # a multiple of 128 (the common case) take the zero-copy path.
        s2 = s_flat[:aligned].reshape(rows, LANE)
        t2 = t_flat[:aligned].reshape(rows, LANE)
        g2 = g_flat[:aligned].reshape(rows, LANE)
    else:
        tail_sum = jnp.float32(0.0)
        s2 = s_flat.reshape(rows, LANE)   # zero-copy lane-dense view
        t2 = t_flat.reshape(rows, LANE)
        g2 = g_flat.reshape(rows, LANE)

    rows8 = (rows // SUBLANE) * SUBLANE          # >= 8, multiple of 8
    block_rows = min(brm, rows8)                 # multiple of 8
    row_blocks = pl.cdiv(rows, block_rows)
    inner_steps = pl.cdiv(row_blocks, num_splits)

    last_partial = (rows % block_rows) != 0
    boundary_start = (row_blocks - 1) if last_partial else row_blocks
    any_boundary = boundary_start < num_splits * inner_steps

    def in_map(p, k):
        # Clamp so the DMA never walks past the last block; clamped (duplicate)
        # blocks are fully masked out inside the kernel.
        return (jnp.minimum(p * inner_steps + k, row_blocks - 1), 0)

    tile_spec = pl.BlockSpec((block_rows, LANE), in_map)

    kernel = functools.partial(
        _kd_loss_kernel,
        lam_rm=lam_rm,
        valid_rows=rows,
        block_rows=block_rows,
        inner_steps=inner_steps,
        boundary_start=boundary_start,
        any_boundary=any_boundary,
    )

    itemsize = jnp.dtype(student_output.dtype).itemsize
    cost = pl.CostEstimate(
        flops=7 * aligned,
        transcendentals=0,
        bytes_accessed=3 * aligned * itemsize + num_splits * SUBLANE * LANE * 4,
    )

    compiler_kwargs = dict(dimension_semantics=("parallel", "arbitrary"))
    if cfg["vmem_limit"] is not None:
        compiler_kwargs["vmem_limit_bytes"] = cfg["vmem_limit"]

    partials = pl.pallas_call(
        kernel,
        out_shape=jax.ShapeDtypeStruct((num_splits, SUBLANE, LANE), jnp.float32),
        grid_spec=pltpu.PrefetchScalarGridSpec(
            num_scalar_prefetch=0,
            grid=(num_splits, inner_steps),       # reduction axis last
            in_specs=[tile_spec, tile_spec, tile_spec],
            out_specs=pl.BlockSpec((1, SUBLANE, LANE), lambda p, k: (p, 0, 0)),
        ),
        compiler_params=pltpu.CompilerParams(**compiler_kwargs),
        cost_estimate=cost,
    )(s2, t2, g2)

    # Apply the 1/N once: mean|s-g| + lambda_rm * mean|s-t|.
    return (jnp.sum(partials) + tail_sum) / jnp.float32(n_elems)


if __name__ == "__main__":
    key = jax.random.PRNGKey(0)
    lambda_p, lambda_rm = 0.5, 0.5

    def ref_loss(s, t, g):
        s = s.astype(jnp.float32)
        t = t.astype(jnp.float32)
        g = g.astype(jnp.float32)
        return (jnp.mean(jnp.abs(s - g))
                + lambda_rm * jnp.mean(jnp.abs(s - t)))

    # (shape, dtype, block_rows_max override) -- small NCHW-style shapes.
    cases = [
        ((2, 4, 16, 16), jnp.float32, None),   # lane-aligned, unmasked path
        ((2, 4, 16, 24), jnp.float32, 16),     # partial last block -> gated mask
        ((2, 3, 11, 16), jnp.float32, None),   # lane-misaligned -> wrapper tail
        ((2, 4, 16, 16), jnp.bfloat16, None),  # bf16 stream + in-kernel f32 cast
    ]

    for shape, dtype, brm in cases:
        key, k1, k2, k3 = jax.random.split(key, 4)
        student = jax.random.normal(k1, shape, dtype=jnp.float32).astype(dtype)
        teacher = jax.random.normal(k2, shape, dtype=jnp.float32).astype(dtype)
        gt = jax.random.normal(k3, shape, dtype=jnp.float32).astype(dtype)

        loss = sample_kd_loss(student, teacher, gt,
                              lambda_p=lambda_p, lambda_rm=lambda_rm,
                              block_rows_max=brm)
        loss = jax.block_until_ready(loss)

        ref = ref_loss(student, teacher, gt)
        assert jnp.allclose(loss, ref, rtol=1e-5, atol=1e-5), (shape, dtype, loss, ref)

    print("KERNEL_OK")
</pallas_src>

<mosaic_0001>
module attributes {stable_mosaic.version = 11 : i64} {
  func.func @_kd_loss_kernel(%arg0: i32, %arg1: i32, %arg2: memref<16x128xf32, #tpu.memory_space<vmem>>, %arg3: memref<16x128xf32, #tpu.memory_space<vmem>>, %arg4: memref<16x128xf32, #tpu.memory_space<vmem>>, %arg5: memref<1x8x128xf32, #tpu.memory_space<vmem>>) attributes {dimension_semantics = [#tpu.dimension_semantics<parallel>, #tpu.dimension_semantics<arbitrary>], iteration_bounds = array<i64: 1, 1>, scalar_prefetch = 0 : i64, scratch_operands = 0 : i64, tpu.core_type = #tpu.core_type<tc>, window_params = [{transform_indices = @transform_0, window_bounds = array<i64: 16, 128>}, {transform_indices = @transform_1, window_bounds = array<i64: 16, 128>}, {transform_indices = @transform_2, window_bounds = array<i64: 16, 128>}, {transform_indices = @transform_3, window_bounds = array<i64: 1, 8, 128>}]} {
    %c0_i32 = arith.constant 0 : i32
    %0 = arith.cmpi eq, %arg1, %c0_i32 : i32
    %1 = arith.extui %0 : i1 to i32
    %c0_i32_0 = arith.constant 0 : i32
    %2 = arith.cmpi ne, %1, %c0_i32_0 : i32
    scf.if %2 {
      %cst_13 = arith.constant 0.000000e+00 : f32
      %21 = vector.broadcast %cst_13 : f32 to vector<1x8x128xf32>
      %c0_14 = arith.constant 0 : index
      %c0_15 = arith.constant 0 : index
      %c0_16 = arith.constant 0 : index
      %22 = vector.load %arg5[%c0_14, %c0_15, %c0_16] : memref<1x8x128xf32, #tpu.memory_space<vmem>>, vector<1x8x128xf32>
      tpu.vector_store %arg5[%c0_14, %c0_15, %c0_16], %21 {strides = array<i32>} : memref<1x8x128xf32, #tpu.memory_space<vmem>>, vector<1x8x128xf32>,
    } else {
    }
    %c0 = arith.constant 0 : index
    %c0_1 = arith.constant 0 : index
    %3 = vector.load %arg2[%c0, %c0_1] : memref<16x128xf32, #tpu.memory_space<vmem>>, vector<16x128xf32>
    %c0_2 = arith.constant 0 : index
    %c0_3 = arith.constant 0 : index
    %4 = vector.load %arg3[%c0_2, %c0_3] : memref<16x128xf32, #tpu.memory_space<vmem>>, vector<16x128xf32>
    %c0_4 = arith.constant 0 : index
    %c0_5 = arith.constant 0 : index
    %5 = vector.load %arg4[%c0_4, %c0_5] : memref<16x128xf32, #tpu.memory_space<vmem>>, vector<16x128xf32>
    %6 = arith.subf %3, %5 : vector<16x128xf32>
    %7 = math.absf %6 : vector<16x128xf32>
    %8 = arith.subf %3, %4 : vector<16x128xf32>
    %9 = math.absf %8 : vector<16x128xf32>
    %cst = arith.constant 5.000000e-01 : f32
    %10 = vector.broadcast %cst : f32 to vector<16x128xf32>
    %11 = arith.mulf %10, %9 : vector<16x128xf32>
    %12 = arith.addf %7, %11 : vector<16x128xf32>
    %c0_6 = arith.constant 0 : index
    %c0_7 = arith.constant 0 : index
    %c0_8 = arith.constant 0 : index
    %13 = vector.load %arg5[%c0_6, %c0_7, %c0_8] : memref<1x8x128xf32, #tpu.memory_space<vmem>>, vector<1x8x128xf32>
    %14 = vector.shape_cast %13 : vector<1x8x128xf32> to vector<8x128xf32>
    %15 = vector.shape_cast %12 : vector<16x128xf32> to vector<2x8x128xf32>
    %cst_9 = arith.constant dense<0.000000e+00> : vector<8x128xf32>
    %16 = vector.multi_reduction <add>, %15, %cst_9 [0] : vector<2x8x128xf32> to vector<8x128xf32>
    %17 = arith.addf %14, %16 : vector<8x128xf32>
    %c0_10 = arith.constant 0 : index
    %c0_11 = arith.constant 0 : index
    %c0_12 = arith.constant 0 : index
    %18 = vector.load %arg5[%c0_10, %c0_11, %c0_12] : memref<1x8x128xf32, #tpu.memory_space<vmem>>, vector<1x8x128xf32>
    %19 = vector.shape_cast %18 : vector<1x8x128xf32> to vector<8x128xf32>
    %20 = vector.shape_cast %17 : vector<8x128xf32> to vector<1x8x128xf32>
    tpu.vector_store %arg5[%c0_10, %c0_11, %c0_12], %20 {strides = array<i32>} : memref<1x8x128xf32, #tpu.memory_space<vmem>>, vector<1x8x128xf32>,
    return
  }
  func.func @transform_0(%arg0: i32, %arg1: i32) -> (i32, i32) {
    %c1_i32 = arith.constant 1 : i32
    %0 = arith.muli %arg0, %c1_i32 : i32
    %1 = arith.addi %0, %arg1 : i32
    %c0_i32 = arith.constant 0 : i32
    %2 = arith.minsi %1, %c0_i32 : i32
    %c0_i32_0 = arith.constant 0 : i32
    %c0_i32_1 = arith.constant 0 : i32
    return %2, %c0_i32_0 : i32, i32
  }
  func.func @transform_1(%arg0: i32, %arg1: i32) -> (i32, i32) {
    %c1_i32 = arith.constant 1 : i32
    %0 = arith.muli %arg0, %c1_i32 : i32
    %1 = arith.addi %0, %arg1 : i32
    %c0_i32 = arith.constant 0 : i32
    %2 = arith.minsi %1, %c0_i32 : i32
    %c0_i32_0 = arith.constant 0 : i32
    %c0_i32_1 = arith.constant 0 : i32
    return %2, %c0_i32_0 : i32, i32
  }
  func.func @transform_2(%arg0: i32, %arg1: i32) -> (i32, i32) {
    %c1_i32 = arith.constant 1 : i32
    %0 = arith.muli %arg0, %c1_i32 : i32
    %1 = arith.addi %0, %arg1 : i32
    %c0_i32 = arith.constant 0 : i32
    %2 = arith.minsi %1, %c0_i32 : i32
    %c0_i32_0 = arith.constant 0 : i32
    %c0_i32_1 = arith.constant 0 : i32
    return %2, %c0_i32_0 : i32, i32
  }
  func.func @transform_3(%arg0: i32, %arg1: i32) -> (i32, i32, i32) {
    %c0_i32 = arith.constant 0 : i32
    %c0_i32_0 = arith.constant 0 : i32
    %c0_i32_1 = arith.constant 0 : i32
    return %arg0, %c0_i32, %c0_i32_0 : i32, i32, i32
  }
}

</mosaic_0001>

<llo_original>
// kernel: sample_kd_loss.1
$region0: #{sample_kd_loss.1}
  #allocation0 [shape = 'u32[]', space=smem, size = 0x4, offset = 0x4, fixed_abs, tag = 'smem constant byte address 0x4 - core index']
  #allocation1 [shape = 'u32[144,128]{1,0:T(1,128)}', space=vmem, size = 0x12000, scoped, tag = 'internal scratch']
  %s0 = inlined_call_operand.vmem [shape: f32[16,128], index: 0, kind: input, shape index: {}]
  %s1 = inlined_call_operand.vmem [shape: f32[16,128], index: 1, kind: input, shape index: {}]
  %s2 = inlined_call_operand.vmem [shape: f32[16,128], index: 2, kind: input, shape index: {}]
  %s3 = inlined_call_operand.vmem [shape: f32[1,8,128], index: 3, kind: output, shape index: {}]
  %s4 = sld [smem:[#allocation0]]
  $region26: #{sample_kd_loss.1} parent=0
    _
  %s6 = ssub.s32 1, %s4
  %s7 = scalar_select 0, %s6, %s4
  // Predicated region
  $region2: #{sample_kd_loss.1} parent=0 // pred_check
    _
  $region3: #{sample_kd_loss.1} parent=0 // pred_check_branch
    %9 = sbr.rel (0) target = $region5
  $region4: #{sample_kd_loss.1} parent=0 // pred_region
    %s10 = sadd.s32 0, 0
    %p11 = scmp.lt.s32.totalorder %s10, 0
    %s12 = scalar_select %p11, %s10, 0
    %s13 = smul.u32 2, %s12
    %p14 = scmp.lt.s32.totalorder %s13, 1
    %s15 = scalar_select %p14, %s13, 1
    %s16 = smul.addr %s15, 8
    %s17 = scalar_lea.vmem %s0, %s16
    %s18 = sadd.s32 0, 0
    %p19 = scmp.lt.s32.totalorder %s18, 0
    %s20 = scalar_select %p19, %s18, 0
    %s21 = smul.u32 2, %s20
  $region5: #{sample_kd_loss.1} parent=0 // pred_fallthru
    _
  // Predicated region
  $region6: #{sample_kd_loss.1} parent=0 // pred_check
    _
  $region7: #{sample_kd_loss.1} parent=0 // pred_check_branch
    %23 = sbr.rel (0) target = $region9
  $region8: #{sample_kd_loss.1} parent=0 // pred_region
    %s24 = sadd.s32 0, 0
    %p25 = scmp.lt.s32.totalorder %s24, 0
    %s26 = scalar_select %p25, %s24, 0
    %s27 = smul.u32 2, %s26
    %p28 = scmp.lt.s32.totalorder %s27, 1
    %s29 = scalar_select %p28, %s27, 1
    %s30 = smul.addr %s29, 8
    %s31 = scalar_lea.vmem %s1, %s30
    %s32 = sadd.s32 0, 0
    %p33 = scmp.lt.s32.totalorder %s32, 0
    %s34 = scalar_select %p33, %s32, 0
    %s35 = smul.u32 2, %s34
  $region9: #{sample_kd_loss.1} parent=0 // pred_fallthru
    _
  // Predicated region
  $region10: #{sample_kd_loss.1} parent=0 // pred_check
    _
  $region11: #{sample_kd_loss.1} parent=0 // pred_check_branch
    %37 = sbr.rel (0) target = $region13
  $region12: #{sample_kd_loss.1} parent=0 // pred_region
    %s38 = sadd.s32 0, 0
    %p39 = scmp.lt.s32.totalorder %s38, 0
    %s40 = scalar_select %p39, %s38, 0
    %s41 = smul.u32 2, %s40
    %p42 = scmp.lt.s32.totalorder %s41, 1
    %s43 = scalar_select %p42, %s41, 1
    %s44 = smul.addr %s43, 8
    %s45 = scalar_lea.vmem %s2, %s44
    %s46 = sadd.s32 0, 0
    %p47 = scmp.lt.s32.totalorder %s46, 0
    %s48 = scalar_select %p47, %s46, 0
    %s49 = smul.u32 2, %s48
  $region13: #{sample_kd_loss.1} parent=0 // pred_fallthru
    _
  %s50 = sadd.s32 0, 0
  %p51 = scmp.lt.s32.totalorder %s50, 0
  %s52 = scalar_select %p51, %s50, 0
  %s53 = smul.u32 2, %s52
  %p54 = scmp.lt.s32.totalorder %s53, 1
  %s55 = scalar_select %p54, %s53, 1
  %s56 = smul.addr %s55, 8
  %s57 = scalar_lea.vmem %s0, %s56
  %s58 = sadd.s32 0, 0
  %p59 = scmp.lt.s32.totalorder %s58, 0
  %s60 = scalar_select %p59, %s58, 0
  %s61 = smul.u32 2, %s60
  %p62 = scmp.lt.s32.totalorder %s61, 1
  %s63 = scalar_select %p62, %s61, 1
  %s64 = smul.addr %s63, 8
  %s65 = scalar_lea.vmem %s1, %s64
  %s66 = sadd.s32 0, 0
  %p67 = scmp.lt.s32.totalorder %s66, 0
  %s68 = scalar_select %p67, %s66, 0
  %s69 = smul.u32 2, %s68
  %p70 = scmp.lt.s32.totalorder %s69, 1
  %s71 = scalar_select %p70, %s69, 1
  %s72 = smul.addr %s71, 8
  %s73 = scalar_lea.vmem %s2, %s72
  %s74 = sadd.s32 0, 0
  %p75 = scmp.lt.s32.totalorder %s74, 0
  %s76 = scalar_select %p75, %s74, 0
  %s77 = smul.u32 2, %s76
  %p78 = scmp.lt.s32.totalorder %s77, 1
  %s79 = scalar_select %p78, %s77, 1
  %s80 = smul.addr %s79, 8
  %s81 = scalar_lea.vmem %s0, %s80
  %s82 = sadd.s32 0, 0
  %p83 = scmp.lt.s32.totalorder %s82, 0
  %s84 = scalar_select %p83, %s82, 0
  %s85 = smul.u32 2, %s84
  %s86 = sadd.s32 0, 0
  %p87 = scmp.lt.s32.totalorder %s86, 0
  %s88 = scalar_select %p87, %s86, 0
  %s89 = smul.u32 2, %s88
  %p90 = scmp.lt.s32.totalorder %s89, 1
  %s91 = scalar_select %p90, %s89, 1
  %s92 = smul.addr %s91, 8
  %s93 = scalar_lea.vmem %s1, %s92
  %s94 = sadd.s32 0, 0
  %p95 = scmp.lt.s32.totalorder %s94, 0
  %s96 = scalar_select %p95, %s94, 0
  %s97 = smul.u32 2, %s96
  %s98 = sadd.s32 0, 0
  %p99 = scmp.lt.s32.totalorder %s98, 0
  %s100 = scalar_select %p99, %s98, 0
  %s101 = smul.u32 2, %s100
  %p102 = scmp.lt.s32.totalorder %s101, 1
  %s103 = scalar_select %p102, %s101, 1
  %s104 = smul.addr %s103, 8
  %s105 = scalar_lea.vmem %s2, %s104
  %s106 = sadd.s32 0, 0
  %p107 = scmp.lt.s32.totalorder %s106, 0
  %s108 = scalar_select %p107, %s106, 0
  %s109 = smul.u32 2, %s108
  %p110 = scmp.eq.s32.totalorder 0, 0
  // Predicated region
  $region14: #{sample_kd_loss.1} parent=0 // pred_check
    %p111 = pneg %p110
  $region15: #{sample_kd_loss.1} parent=0 // pred_check_branch
    %113 = sbr.rel (%p111) target = $region17
  $region16: #{sample_kd_loss.1} parent=0 // pred_region
    %114 = vst [vmem:[%s3] sm:$0xff] 0.0
  $region17: #{sample_kd_loss.1} parent=0 // pred_fallthru
    _
  %v115 = vld [vmem:[%s81] sm:$0xff]
  %v116 = vld [vmem:[%s81 + $0x8] sm:$0xff]
  %v117 = vld [vmem:[%s93] sm:$0xff]
  %v118 = vld [vmem:[%s93 + $0x8] sm:$0xff]
  %v119 = vld [vmem:[%s105] sm:$0xff]
  %v120 = vld [vmem:[%s105 + $0x8] sm:$0xff]
  %v121 = vsub.f32 %v115, %v119
  %v122 = vsub.f32 %v116, %v120
  %v123 = vand.u32 2147483647, %v121
  %v124 = vand.u32 2147483647, %v122
  %v125 = vsub.f32 %v115, %v117
  %v126 = vsub.f32 %v116, %v118
  %v127 = vand.u32 2147483647, %v125
  %v128 = vand.u32 2147483647, %v126
  %v129 = vmul.f32 %v127, 0.5
  %v130 = vmul.f32 %v128, 0.5
  %v131 = vadd.f32 %v123, %v129
  %v132 = vadd.f32 %v124, %v130
  %v133 = vld [vmem:[%s3] sm:$0xff]
  %v134 = vadd.f32 %v131, %v132
  %v135 = vadd.f32 %v133, %v134
  %136 = vst [vmem:[%s3] sm:$0xff] %v135
  // Predicated region
  $region18: #{sample_kd_loss.1} parent=0 // pred_check
    _
  $region19: #{sample_kd_loss.1} parent=0 // pred_check_branch
    %138 = sbr.rel (0) target = $region21
  $region20: #{sample_kd_loss.1} parent=0 // pred_region
    _
  $region21: #{sample_kd_loss.1} parent=0 // pred_fallthru
    _
  // Predicated region
  $region22: #{sample_kd_loss.1} parent=0 // pred_check
    _
  $region23: #{sample_kd_loss.1} parent=0 // pred_check_branch
    %140 = sbr.rel (0) target = $region25
  $region24: #{sample_kd_loss.1} parent=0 // pred_region
    _
  $region25: #{sample_kd_loss.1} parent=0 // pred_fallthru
    _

</llo_original>
